<compile_context>
chip_gen: v7x
topology: tpu7x:2x2x1
jax: 0.10.0
libtpu: 0.0.40
codegen_flags: <defaults>
</compile_context>

<pallas_src>
import jax
import jax.numpy as jnp
from jax.experimental import pallas as pl

# Small synthetic shapes consistent with the module's forward.
B, S, H, FF, H2, V = 2, 8, 32, 64, 16, 64       # H2 = hidden // 2
BS = B * S                                      # batch folded into the matmul M dim

# ---- packed bf16 weight slab: (192, 128). Every matrix starts at lane 0 on a
#      16-sublane-aligned row (bf16 sublane tile = 16) -> slices are free views.
R_WQKV, R_WO, R_W1, R_WR1, R_W2 = 0, H, 2 * H, 3 * H, 4 * H     # 0, 32, 64, 96, 128
W_ROWS = 4 * H + FF                                             # 192

# ---- f32 vector slab: (32, 128); rows 0..10 = parameter vectors,
#      rows 16..31 = per-call (BS, BS) additive attention bias (block-diag + pad).
(ROW_BQKV, ROW_BO, ROW_G1, ROW_BE1, ROW_B1, ROW_B2, ROW_G2, ROW_BE2,
 ROW_BR1, ROW_BR2, ROW_WR2) = range(11)
ROW_BIAS = 16
V_ROWS = ROW_BIAS + BS                                          # 32

SCALE = 1.0 / float(H) ** 0.5


def _gelu(x):
    # tanh-approx GELU (Mosaic-friendly; torch nn.GELU exact-erf differs ~1e-3)
    c = 0.7978845608028654  # sqrt(2/pi)
    return 0.5 * x * (1.0 + jnp.tanh(c * (x + 0.044715 * x * x * x)))


def _layernorm(x, gamma, beta, eps=1e-7):
    mu = jnp.mean(x, axis=-1, keepdims=True)
    var = jnp.mean((x - mu) ** 2, axis=-1, keepdims=True)
    return (x - mu) * jax.lax.rsqrt(var + eps) * gamma + beta


def reward_kernel(x_ref, w_ref, vecs_ref, out_ref):
    # Whole folded batch per invocation: x is (B*S, H) f32 activations.
    x = x_ref[...]

    # bf16 weight blocks; lane-0 aligned + 16-sublane-aligned rows -> free views.
    wqkv = w_ref[R_WQKV:R_WQKV + H, :3 * H]        # (H, 3H)
    wo = w_ref[R_WO:R_WO + H, :H]                  # (H, H)
    w1 = w_ref[R_W1:R_W1 + H, :FF]                 # (H, FF)
    wr1 = w_ref[R_WR1:R_WR1 + H, :H2]              # (H, H2)
    w2 = w_ref[R_W2:R_W2 + FF, :H]                 # (FF, H)

    # Parameter vectors (hoisted once; each is used exactly once below).
    vecs = vecs_ref[...]
    bqkv = vecs[ROW_BQKV:ROW_BQKV + 1, :3 * H]
    bo = vecs[ROW_BO:ROW_BO + 1, :H]
    g1 = vecs[ROW_G1:ROW_G1 + 1, :H]
    be1 = vecs[ROW_BE1:ROW_BE1 + 1, :H]
    b1 = vecs[ROW_B1:ROW_B1 + 1, :FF]
    b2 = vecs[ROW_B2:ROW_B2 + 1, :H]
    g2 = vecs[ROW_G2:ROW_G2 + 1, :H]
    be2 = vecs[ROW_BE2:ROW_BE2 + 1, :H]
    br1 = vecs[ROW_BR1:ROW_BR1 + 1, :H2]
    br2 = vecs[ROW_BR2:ROW_BR2 + 1, 0:1]
    wr2 = vecs[ROW_WR2:ROW_WR2 + 1, :H2]
    attn_bias = vecs[ROW_BIAS:ROW_BIAS + BS, :BS]  # block-diagonal + key padding

    def mm(a, w):
        # bf16 MXU matmul (weights already bf16), f32 accumulation.
        return jnp.dot(a.astype(jnp.bfloat16), w, preferred_element_type=jnp.float32)

    # -------- synthetic encoder layer (stand-in for DeBERTa base model) ------
    qkv = mm(x, wqkv) + bqkv                                          # (BS, 3H)
    q, k, v = qkv[:, :H], qkv[:, H:2 * H], qkv[:, 2 * H:]

    # One (BS, BS) score block for the whole folded batch; cross-sequence and
    # padded-key entries are killed by the precomputed additive bias.
    scores = jax.lax.dot_general(q, k, (((1,), (1,)), ((), ())),
                                 preferred_element_type=jnp.float32) * SCALE
    scores = scores + attn_bias
    m = jnp.max(scores, axis=-1, keepdims=True)
    p = jnp.exp(scores - m)
    attn = p * pl.reciprocal(jnp.sum(p, axis=-1, keepdims=True), approx=True)
    ctx = jnp.dot(attn, v, preferred_element_type=jnp.float32)        # (BS, H)
    x = _layernorm(x + mm(ctx, wo) + bo, g1, be1)

    h = _gelu(mm(x, w1) + b1)                                         # (BS, FF)
    x = _layernorm(x + mm(h, w2) + b2, g2, be2)

    # -------- reward head on every row (tiny); CLS rows picked in the wrapper.
    # dropout = identity at inference.
    r1 = _gelu(mm(x, wr1) + br1)                                      # (BS, H2)
    r = jnp.sum(r1 * wr2, axis=-1, keepdims=True) + br2               # (BS, 1)
    r = 3.0 * jnp.tanh(r * (1.0 / 3.0))
    out_ref[...] = jnp.broadcast_to(r, (BS, 128))                     # lane-dense store


def init_params(key):
    ks = jax.random.split(key, 9)
    return {
        'emb': 0.02 * jax.random.normal(ks[0], (V, H), jnp.float32),
        'wq': 0.02 * jax.random.normal(ks[1], (H, H), jnp.float32),
        'wk': 0.02 * jax.random.normal(ks[2], (H, H), jnp.float32),
        'wv': 0.02 * jax.random.normal(ks[3], (H, H), jnp.float32),
        'wo': 0.02 * jax.random.normal(ks[4], (H, H), jnp.float32),
        'bq': jnp.zeros((1, H), jnp.float32),
        'bk': jnp.zeros((1, H), jnp.float32),
        'bv': jnp.zeros((1, H), jnp.float32),
        'bo': jnp.zeros((1, H), jnp.float32),
        'g1': jnp.ones((1, H), jnp.float32),
        'be1': jnp.zeros((1, H), jnp.float32),
        'w1': 0.02 * jax.random.normal(ks[5], (H, FF), jnp.float32),
        'b1': jnp.zeros((1, FF), jnp.float32),
        'w2': 0.02 * jax.random.normal(ks[6], (FF, H), jnp.float32),
        'b2': jnp.zeros((1, H), jnp.float32),
        'g2': jnp.ones((1, H), jnp.float32),
        'be2': jnp.zeros((1, H), jnp.float32),
        'wr1': 0.05 * jax.random.normal(ks[7], (H, H2), jnp.float32),
        'br1': 0.01 * jnp.ones((1, H2), jnp.float32),
        'wr2': 0.05 * jax.random.normal(ks[8], (H2, 1), jnp.float32),
        'br2': jnp.zeros((1, 1), jnp.float32),
    }


def pack_params(p):
    """Pack parameters into: emb (f32), bf16 weight slab, f32 vector slab."""
    wqkv = jnp.concatenate([p['wq'], p['wk'], p['wv']], axis=1)           # (H, 3H)
    wslab = jnp.zeros((W_ROWS, 128), jnp.bfloat16)
    wslab = wslab.at[R_WQKV:R_WQKV + H, :3 * H].set(wqkv.astype(jnp.bfloat16))
    wslab = wslab.at[R_WO:R_WO + H, :H].set(p['wo'].astype(jnp.bfloat16))
    wslab = wslab.at[R_W1:R_W1 + H, :FF].set(p['w1'].astype(jnp.bfloat16))
    wslab = wslab.at[R_WR1:R_WR1 + H, :H2].set(p['wr1'].astype(jnp.bfloat16))
    wslab = wslab.at[R_W2:R_W2 + FF, :H].set(p['w2'].astype(jnp.bfloat16))

    vecs = jnp.zeros((V_ROWS, 128), jnp.float32)
    vecs = vecs.at[ROW_BQKV, :3 * H].set(
        jnp.concatenate([p['bq'], p['bk'], p['bv']], axis=1)[0])
    vecs = vecs.at[ROW_BO, :H].set(p['bo'][0])
    vecs = vecs.at[ROW_G1, :H].set(p['g1'][0])
    vecs = vecs.at[ROW_BE1, :H].set(p['be1'][0])
    vecs = vecs.at[ROW_B1, :FF].set(p['b1'][0])
    vecs = vecs.at[ROW_B2, :H].set(p['b2'][0])
    vecs = vecs.at[ROW_G2, :H].set(p['g2'][0])
    vecs = vecs.at[ROW_BE2, :H].set(p['be2'][0])
    vecs = vecs.at[ROW_BR1, :H2].set(p['br1'][0])
    vecs = vecs.at[ROW_BR2, 0].set(p['br2'][0, 0])
    vecs = vecs.at[ROW_WR2, :H2].set(p['wr2'][:, 0])
    return p['emb'], wslab, vecs


def neural_reward_model(input_ids, attention_mask, packed):
    emb, wslab, vecs0 = packed
    b, s = input_ids.shape
    n = b * s

    # Token-embedding gather in XLA (cheaper than an in-kernel one-hot matmul
    # at this size, and removes the ids / mask micro-inputs + emb-table DMA).
    x = emb[input_ids.astype(jnp.int32)].astype(jnp.float32).reshape(n, H)

    # Block-diagonal (per-sequence) + key-padding additive attention bias,
    # packed into the f32 vector slab so the kernel has exactly 3 inputs.
    seg = jnp.arange(n, dtype=jnp.int32) // s
    key_ok = attention_mask.reshape(n) > 0
    allowed = (seg[:, None] == seg[None, :]) & key_ok[None, :]
    bias = jnp.where(allowed, 0.0, -1e9).astype(jnp.float32)              # (n, n)
    vecs = vecs0.at[ROW_BIAS:ROW_BIAS + n, :n].set(bias)

    out = pl.pallas_call(
        reward_kernel,
        out_shape=jax.ShapeDtypeStruct((n, 128), jnp.float32),
        grid=(1,),                                           # single fused invocation
        in_specs=[
            pl.BlockSpec((n, H), lambda i: (0, 0)),          # folded activations (f32)
            pl.BlockSpec((W_ROWS, 128), lambda i: (0, 0)),   # bf16 weight slab
            pl.BlockSpec((V_ROWS, 128), lambda i: (0, 0)),   # f32 biases + attn bias
        ],
        out_specs=pl.BlockSpec((n, 128), lambda i: (0, 0)),  # lane-dense output
    )(x, wslab, vecs)
    return out[::s, 0]                                       # CLS rows -> (B,)


def _reference(input_ids, attention_mask, p):
    # Pure-JAX mirror of the kernel math (bf16-rounded weights, exact softmax).
    q16 = lambda w: w.astype(jnp.bfloat16).astype(jnp.float32)
    x = p['emb'][input_ids].astype(jnp.float32)                       # (B, S, H)
    mask = attention_mask.astype(jnp.float32)[:, None, :]             # (B, 1, S)
    wqkv = q16(jnp.concatenate([p['wq'], p['wk'], p['wv']], axis=1))
    bqkv = jnp.concatenate([p['bq'], p['bk'], p['bv']], axis=1)
    qkv = jnp.einsum('bsh,hd->bsd', x, wqkv) + bqkv
    q, k, v = qkv[..., :H], qkv[..., H:2 * H], qkv[..., 2 * H:]
    scores = jnp.einsum('bqh,bkh->bqk', q, k) / jnp.sqrt(jnp.float32(H))
    scores = scores + (1.0 - mask) * (-1e9)
    attn = jax.nn.softmax(scores, axis=-1)
    ctx = jnp.einsum('bqk,bkh->bqh', attn, v)
    ao = jnp.einsum('bsh,hd->bsd', ctx, q16(p['wo'])) + p['bo']
    x = _layernorm(x + ao, p['g1'], p['be1'])
    h = _gelu(jnp.einsum('bsh,hf->bsf', x, q16(p['w1'])) + p['b1'])
    ffn = jnp.einsum('bsf,fh->bsh', h, q16(p['w2'])) + p['b2']
    x = _layernorm(x + ffn, p['g2'], p['be2'])
    cls = x[:, 0, :]
    r1 = _gelu(cls @ q16(p['wr1']) + p['br1'])
    r = r1 @ p['wr2'] + p['br2']
    return (3.0 * jnp.tanh(r / 3.0))[:, 0]


if __name__ == "__main__":
    key = jax.random.PRNGKey(0)
    k_params, k_ids = jax.random.split(key)
    params = init_params(k_params)
    packed = pack_params(params)

    input_ids = jax.random.randint(k_ids, (B, S), 0, V, dtype=jnp.int32)
    attention_mask = jnp.ones((B, S), dtype=jnp.int32).at[1, 6:].set(0)  # pad tail of 2nd seq

    reward = jax.jit(neural_reward_model)(input_ids, attention_mask, packed)
    jax.block_until_ready(reward)

    ref = _reference(input_ids, attention_mask, params)
    assert reward.shape == (B,)
    assert bool(jnp.all(jnp.abs(reward) <= 3.0))                 # 3*tanh(x/3) bound
    assert bool(jnp.allclose(reward, ref, atol=1e-2)), (reward, ref)
    print("KERNEL_OK")
</pallas_src>

<mosaic_0001>
module attributes {stable_mosaic.version = 11 : i64} {
  func.func @reward_kernel(%arg0: i32, %arg1: memref<16x32xf32, #tpu.memory_space<vmem>>, %arg2: memref<192x128xbf16, #tpu.memory_space<vmem>>, %arg3: memref<32x128xf32, #tpu.memory_space<vmem>>, %arg4: memref<16x128xf32, #tpu.memory_space<vmem>>) attributes {dimension_semantics = [#tpu.dimension_semantics<arbitrary>], iteration_bounds = array<i64: 1>, scalar_prefetch = 0 : i64, scratch_operands = 0 : i64, tpu.core_type = #tpu.core_type<tc>, window_params = [{pipeline_mode = #tpu.pipeline_mode<synchronous>, transform_indices = @transform_0, window_bounds = array<i64: 16, 32>}, {pipeline_mode = #tpu.pipeline_mode<synchronous>, transform_indices = @transform_1, window_bounds = array<i64: 192, 128>}, {pipeline_mode = #tpu.pipeline_mode<synchronous>, transform_indices = @transform_2, window_bounds = array<i64: 32, 128>}, {pipeline_mode = #tpu.pipeline_mode<synchronous>, transform_indices = @transform_3, window_bounds = array<i64: 16, 128>}]} {
    %c0 = arith.constant 0 : index
    %c0_0 = arith.constant 0 : index
    %0 = vector.load %arg1[%c0, %c0_0] : memref<16x32xf32, #tpu.memory_space<vmem>>, vector<16x32xf32>
    %c0_1 = arith.constant 0 : index
    %c0_2 = arith.constant 0 : index
    %1 = vector.load %arg2[%c0_1, %c0_2] : memref<192x128xbf16, #tpu.memory_space<vmem>>, vector<32x96xbf16>
    %c32 = arith.constant 32 : index
    %c0_3 = arith.constant 0 : index
    %2 = vector.load %arg2[%c32, %c0_3] : memref<192x128xbf16, #tpu.memory_space<vmem>>, vector<32x32xbf16>
    %c64 = arith.constant 64 : index
    %c0_4 = arith.constant 0 : index
    %3 = vector.load %arg2[%c64, %c0_4] : memref<192x128xbf16, #tpu.memory_space<vmem>>, vector<32x64xbf16>
    %c96 = arith.constant 96 : index
    %c0_5 = arith.constant 0 : index
    %4 = vector.load %arg2[%c96, %c0_5] : memref<192x128xbf16, #tpu.memory_space<vmem>>, vector<32x16xbf16>
    %c128 = arith.constant 128 : index
    %c0_6 = arith.constant 0 : index
    %5 = vector.load %arg2[%c128, %c0_6] : memref<192x128xbf16, #tpu.memory_space<vmem>>, vector<64x32xbf16>
    %c0_7 = arith.constant 0 : index
    %c0_8 = arith.constant 0 : index
    %6 = vector.load %arg3[%c0_7, %c0_8] : memref<32x128xf32, #tpu.memory_space<vmem>>, vector<32x128xf32>
    %7 = vector.extract_strided_slice %6 {offsets = [0, 0], sizes = [1, 96], strides = [1, 1]} : vector<32x128xf32> to vector<1x96xf32>
    %8 = vector.extract_strided_slice %6 {offsets = [1, 0], sizes = [1, 32], strides = [1, 1]} : vector<32x128xf32> to vector<1x32xf32>
    %9 = vector.extract_strided_slice %6 {offsets = [2, 0], sizes = [1, 32], strides = [1, 1]} : vector<32x128xf32> to vector<1x32xf32>
    %10 = vector.extract_strided_slice %6 {offsets = [3, 0], sizes = [1, 32], strides = [1, 1]} : vector<32x128xf32> to vector<1x32xf32>
    %11 = vector.extract_strided_slice %6 {offsets = [4, 0], sizes = [1, 64], strides = [1, 1]} : vector<32x128xf32> to vector<1x64xf32>
    %12 = vector.extract_strided_slice %6 {offsets = [5, 0], sizes = [1, 32], strides = [1, 1]} : vector<32x128xf32> to vector<1x32xf32>
    %13 = vector.extract_strided_slice %6 {offsets = [6, 0], sizes = [1, 32], strides = [1, 1]} : vector<32x128xf32> to vector<1x32xf32>
    %14 = vector.extract_strided_slice %6 {offsets = [7, 0], sizes = [1, 32], strides = [1, 1]} : vector<32x128xf32> to vector<1x32xf32>
    %15 = vector.extract_strided_slice %6 {offsets = [8, 0], sizes = [1, 16], strides = [1, 1]} : vector<32x128xf32> to vector<1x16xf32>
    %16 = vector.extract_strided_slice %6 {offsets = [9, 0], sizes = [1, 1], strides = [1, 1]} : vector<32x128xf32> to vector<1x1xf32>
    %17 = vector.extract_strided_slice %6 {offsets = [10, 0], sizes = [1, 16], strides = [1, 1]} : vector<32x128xf32> to vector<1x16xf32>
    %18 = vector.extract_strided_slice %6 {offsets = [16, 0], sizes = [16, 16], strides = [1, 1]} : vector<32x128xf32> to vector<16x16xf32>
    %19 = arith.truncf %0 : vector<16x32xf32> to vector<16x32xbf16>
    %cst = arith.constant dense<0.000000e+00> : vector<16x96xf32>
    %20 = tpu.matmul %19, %1, %cst {dimension_numbers = #tpu.dot_dimension_numbers<[1], [0], [0], [1], [0, 0, 1, 1], [], []>} : vector<16x32xbf16>, vector<32x96xbf16>, vector<16x96xf32> -> vector<16x96xf32>
    %21 = vector.broadcast %7 : vector<1x96xf32> to vector<16x96xf32>
    %22 = arith.addf %20, %21 : vector<16x96xf32>
    %23 = vector.extract_strided_slice %22 {offsets = [0, 0], sizes = [16, 32], strides = [1, 1]} : vector<16x96xf32> to vector<16x32xf32>
    %24 = vector.extract_strided_slice %22 {offsets = [0, 32], sizes = [16, 32], strides = [1, 1]} : vector<16x96xf32> to vector<16x32xf32>
    %25 = vector.extract_strided_slice %22 {offsets = [0, 64], sizes = [16, 32], strides = [1, 1]} : vector<16x96xf32> to vector<16x32xf32>
    %cst_9 = arith.constant dense<0.000000e+00> : vector<16x16xf32>
    %26 = tpu.matmul %23, %24, %cst_9 {dimension_numbers = #tpu.dot_dimension_numbers<[1], [1], [0], [0], [0, 0, 1, 0], [], []>} : vector<16x32xf32>, vector<16x32xf32>, vector<16x16xf32> -> vector<16x16xf32>
    %cst_10 = arith.constant 0.176776692 : f32
    %27 = vector.broadcast %cst_10 : f32 to vector<16x16xf32>
    %28 = arith.mulf %26, %27 : vector<16x16xf32>
    %29 = arith.addf %28, %18 : vector<16x16xf32>
    %cst_11 = arith.constant dense<0xFF800000> : vector<16xf32>
    %30 = vector.multi_reduction <maximumf>, %29, %cst_11 [1] : vector<16x16xf32> to vector<16xf32>
    %31 = vector.shape_cast %30 : vector<16xf32> to vector<16x1xf32>
    %32 = vector.broadcast %31 : vector<16x1xf32> to vector<16x16xf32>
    %33 = arith.subf %29, %32 : vector<16x16xf32>
    %34 = math.exp %33 : vector<16x16xf32>
    %cst_12 = arith.constant dense<0.000000e+00> : vector<16xf32>
    %35 = vector.multi_reduction <add>, %34, %cst_12 [1] : vector<16x16xf32> to vector<16xf32>
    %36 = vector.shape_cast %35 : vector<16xf32> to vector<16x1xf32>
    %37 = tpu.reciprocal %36 {approx = true} : vector<16x1xf32> -> vector<16x1xf32>
    %38 = vector.broadcast %37 : vector<16x1xf32> to vector<16x16xf32>
    %39 = arith.mulf %34, %38 : vector<16x16xf32>
    %cst_13 = arith.constant dense<0.000000e+00> : vector<16x32xf32>
    %40 = tpu.matmul %39, %25, %cst_13 {dimension_numbers = #tpu.dot_dimension_numbers<[1], [0], [0], [1], [0, 0, 1, 1], [], []>} : vector<16x16xf32>, vector<16x32xf32>, vector<16x32xf32> -> vector<16x32xf32>
    %41 = arith.truncf %40 : vector<16x32xf32> to vector<16x32xbf16>
    %cst_14 = arith.constant dense<0.000000e+00> : vector<16x32xf32>
    %42 = tpu.matmul %41, %2, %cst_14 {dimension_numbers = #tpu.dot_dimension_numbers<[1], [0], [0], [1], [0, 0, 1, 1], [], []>} : vector<16x32xbf16>, vector<32x32xbf16>, vector<16x32xf32> -> vector<16x32xf32>
    %43 = arith.addf %0, %42 : vector<16x32xf32>
    %44 = vector.broadcast %8 : vector<1x32xf32> to vector<16x32xf32>
    %45 = arith.addf %43, %44 : vector<16x32xf32>
    %cst_15 = arith.constant dense<0.000000e+00> : vector<16xf32>
    %46 = vector.multi_reduction <add>, %45, %cst_15 [1] : vector<16x32xf32> to vector<16xf32>
    %47 = vector.shape_cast %46 : vector<16xf32> to vector<16x1xf32>
    %cst_16 = arith.constant 3.200000e+01 : f32
    %48 = vector.broadcast %cst_16 : f32 to vector<16x1xf32>
    %49 = arith.divf %47, %48 : vector<16x1xf32>
    %50 = vector.broadcast %49 : vector<16x1xf32> to vector<16x32xf32>
    %51 = arith.subf %45, %50 : vector<16x32xf32>
    %52 = arith.mulf %51, %51 : vector<16x32xf32>
    %cst_17 = arith.constant dense<0.000000e+00> : vector<16xf32>
    %53 = vector.multi_reduction <add>, %52, %cst_17 [1] : vector<16x32xf32> to vector<16xf32>
    %54 = vector.shape_cast %53 : vector<16xf32> to vector<16x1xf32>
    %cst_18 = arith.constant 3.200000e+01 : f32
    %55 = vector.broadcast %cst_18 : f32 to vector<16x1xf32>
    %56 = arith.divf %54, %55 : vector<16x1xf32>
    %57 = vector.broadcast %49 : vector<16x1xf32> to vector<16x32xf32>
    %58 = arith.subf %45, %57 : vector<16x32xf32>
    %cst_19 = arith.constant 1.000000e-07 : f32
    %59 = vector.broadcast %cst_19 : f32 to vector<16x1xf32>
    %60 = arith.addf %56, %59 : vector<16x1xf32>
    %61 = math.rsqrt %60 : vector<16x1xf32>
    %62 = vector.broadcast %61 : vector<16x1xf32> to vector<16x32xf32>
    %63 = arith.mulf %58, %62 : vector<16x32xf32>
    %64 = vector.broadcast %9 : vector<1x32xf32> to vector<16x32xf32>
    %65 = arith.mulf %63, %64 : vector<16x32xf32>
    %66 = vector.broadcast %10 : vector<1x32xf32> to vector<16x32xf32>
    %67 = arith.addf %65, %66 : vector<16x32xf32>
    %68 = arith.truncf %67 : vector<16x32xf32> to vector<16x32xbf16>
    %cst_20 = arith.constant dense<0.000000e+00> : vector<16x64xf32>
    %69 = tpu.matmul %68, %3, %cst_20 {dimension_numbers = #tpu.dot_dimension_numbers<[1], [0], [0], [1], [0, 0, 1, 1], [], []>} : vector<16x32xbf16>, vector<32x64xbf16>, vector<16x64xf32> -> vector<16x64xf32>
    %70 = vector.broadcast %11 : vector<1x64xf32> to vector<16x64xf32>
    %71 = arith.addf %69, %70 : vector<16x64xf32>
    %cst_21 = arith.constant 5.000000e-01 : f32
    %72 = vector.broadcast %cst_21 : f32 to vector<16x64xf32>
    %73 = arith.mulf %72, %71 : vector<16x64xf32>
    %cst_22 = arith.constant 4.471500e-02 : f32
    %74 = vector.broadcast %cst_22 : f32 to vector<16x64xf32>
    %75 = arith.mulf %74, %71 : vector<16x64xf32>
    %76 = arith.mulf %75, %71 : vector<16x64xf32>
    %77 = arith.mulf %76, %71 : vector<16x64xf32>
    %78 = arith.addf %71, %77 : vector<16x64xf32>
    %cst_23 = arith.constant 0.797884583 : f32
    %79 = vector.broadcast %cst_23 : f32 to vector<16x64xf32>
    %80 = arith.mulf %79, %78 : vector<16x64xf32>
    %81 = math.tanh %80 : vector<16x64xf32>
    %cst_24 = arith.constant 1.000000e+00 : f32
    %82 = vector.broadcast %cst_24 : f32 to vector<16x64xf32>
    %83 = arith.addf %82, %81 : vector<16x64xf32>
    %84 = arith.mulf %73, %83 : vector<16x64xf32>
    %85 = arith.truncf %84 : vector<16x64xf32> to vector<16x64xbf16>
    %cst_25 = arith.constant dense<0.000000e+00> : vector<16x32xf32>
    %86 = tpu.matmul %85, %5, %cst_25 {dimension_numbers = #tpu.dot_dimension_numbers<[1], [0], [0], [1], [0, 0, 1, 1], [], []>} : vector<16x64xbf16>, vector<64x32xbf16>, vector<16x32xf32> -> vector<16x32xf32>
    %87 = arith.addf %67, %86 : vector<16x32xf32>
    %88 = vector.broadcast %12 : vector<1x32xf32> to vector<16x32xf32>
    %89 = arith.addf %87, %88 : vector<16x32xf32>
    %cst_26 = arith.constant dense<0.000000e+00> : vector<16xf32>
    %90 = vector.multi_reduction <add>, %89, %cst_26 [1] : vector<16x32xf32> to vector<16xf32>
    %91 = vector.shape_cast %90 : vector<16xf32> to vector<16x1xf32>
    %cst_27 = arith.constant 3.200000e+01 : f32
    %92 = vector.broadcast %cst_27 : f32 to vector<16x1xf32>
    %93 = arith.divf %91, %92 : vector<16x1xf32>
    %94 = vector.broadcast %93 : vector<16x1xf32> to vector<16x32xf32>
    %95 = arith.subf %89, %94 : vector<16x32xf32>
    %96 = arith.mulf %95, %95 : vector<16x32xf32>
    %cst_28 = arith.constant dense<0.000000e+00> : vector<16xf32>
    %97 = vector.multi_reduction <add>, %96, %cst_28 [1] : vector<16x32xf32> to vector<16xf32>
    %98 = vector.shape_cast %97 : vector<16xf32> to vector<16x1xf32>
    %cst_29 = arith.constant 3.200000e+01 : f32
    %99 = vector.broadcast %cst_29 : f32 to vector<16x1xf32>
    %100 = arith.divf %98, %99 : vector<16x1xf32>
    %101 = vector.broadcast %93 : vector<16x1xf32> to vector<16x32xf32>
    %102 = arith.subf %89, %101 : vector<16x32xf32>
    %cst_30 = arith.constant 1.000000e-07 : f32
    %103 = vector.broadcast %cst_30 : f32 to vector<16x1xf32>
    %104 = arith.addf %100, %103 : vector<16x1xf32>
    %105 = math.rsqrt %104 : vector<16x1xf32>
    %106 = vector.broadcast %105 : vector<16x1xf32> to vector<16x32xf32>
    %107 = arith.mulf %102, %106 : vector<16x32xf32>
    %108 = vector.broadcast %13 : vector<1x32xf32> to vector<16x32xf32>
    %109 = arith.mulf %107, %108 : vector<16x32xf32>
    %110 = vector.broadcast %14 : vector<1x32xf32> to vector<16x32xf32>
    %111 = arith.addf %109, %110 : vector<16x32xf32>
    %112 = arith.truncf %111 : vector<16x32xf32> to vector<16x32xbf16>
    %cst_31 = arith.constant dense<0.000000e+00> : vector<16x16xf32>
    %113 = tpu.matmul %112, %4, %cst_31 {dimension_numbers = #tpu.dot_dimension_numbers<[1], [0], [0], [1], [0, 0, 1, 1], [], []>} : vector<16x32xbf16>, vector<32x16xbf16>, vector<16x16xf32> -> vector<16x16xf32>
    %114 = vector.broadcast %15 : vector<1x16xf32> to vector<16x16xf32>
    %115 = arith.addf %113, %114 : vector<16x16xf32>
    %cst_32 = arith.constant 5.000000e-01 : f32
    %116 = vector.broadcast %cst_32 : f32 to vector<16x16xf32>
    %117 = arith.mulf %116, %115 : vector<16x16xf32>
    %cst_33 = arith.constant 4.471500e-02 : f32
    %118 = vector.broadcast %cst_33 : f32 to vector<16x16xf32>
    %119 = arith.mulf %118, %115 : vector<16x16xf32>
    %120 = arith.mulf %119, %115 : vector<16x16xf32>
    %121 = arith.mulf %120, %115 : vector<16x16xf32>
    %122 = arith.addf %115, %121 : vector<16x16xf32>
    %cst_34 = arith.constant 0.797884583 : f32
    %123 = vector.broadcast %cst_34 : f32 to vector<16x16xf32>
    %124 = arith.mulf %123, %122 : vector<16x16xf32>
    %125 = math.tanh %124 : vector<16x16xf32>
    %cst_35 = arith.constant 1.000000e+00 : f32
    %126 = vector.broadcast %cst_35 : f32 to vector<16x16xf32>
    %127 = arith.addf %126, %125 : vector<16x16xf32>
    %128 = arith.mulf %117, %127 : vector<16x16xf32>
    %129 = vector.broadcast %17 : vector<1x16xf32> to vector<16x16xf32>
    %130 = arith.mulf %128, %129 : vector<16x16xf32>
    %cst_36 = arith.constant dense<0.000000e+00> : vector<16xf32>
    %131 = vector.multi_reduction <add>, %130, %cst_36 [1] : vector<16x16xf32> to vector<16xf32>
    %132 = vector.shape_cast %131 : vector<16xf32> to vector<16x1xf32>
    %133 = vector.broadcast %16 : vector<1x1xf32> to vector<16x1xf32>
    %134 = arith.addf %132, %133 : vector<16x1xf32>
    %cst_37 = arith.constant 0.333333343 : f32
    %135 = vector.broadcast %cst_37 : f32 to vector<16x1xf32>
    %136 = arith.mulf %134, %135 : vector<16x1xf32>
    %137 = math.tanh %136 : vector<16x1xf32>
    %cst_38 = arith.constant 3.000000e+00 : f32
    %138 = vector.broadcast %cst_38 : f32 to vector<16x1xf32>
    %139 = arith.mulf %138, %137 : vector<16x1xf32>
    %140 = vector.shape_cast %139 : vector<16x1xf32> to vector<16x1xf32>
    %141 = vector.broadcast %140 : vector<16x1xf32> to vector<16x128xf32>
    %c0_39 = arith.constant 0 : index
    %c0_40 = arith.constant 0 : index
    %142 = vector.load %arg4[%c0_39, %c0_40] : memref<16x128xf32, #tpu.memory_space<vmem>>, vector<16x128xf32>
    tpu.vector_store %arg4[%c0_39, %c0_40], %141 {strides = array<i32>} : memref<16x128xf32, #tpu.memory_space<vmem>>, vector<16x128xf32>,
    return
  }
  func.func @transform_0(%arg0: i32) -> (i32, i32) {
    %c0_i32 = arith.constant 0 : i32
    %c0_i32_0 = arith.constant 0 : i32
    %c0_i32_1 = arith.constant 0 : i32
    return %c0_i32, %c0_i32_0 : i32, i32
  }
  func.func @transform_1(%arg0: i32) -> (i32, i32) {
    %c0_i32 = arith.constant 0 : i32
    %c0_i32_0 = arith.constant 0 : i32
    %c0_i32_1 = arith.constant 0 : i32
    return %c0_i32, %c0_i32_0 : i32, i32
  }
  func.func @transform_2(%arg0: i32) -> (i32, i32) {
    %c0_i32 = arith.constant 0 : i32
    %c0_i32_0 = arith.constant 0 : i32
    %c0_i32_1 = arith.constant 0 : i32
    return %c0_i32, %c0_i32_0 : i32, i32
  }
  func.func @transform_3(%arg0: i32) -> (i32, i32) {
    %c0_i32 = arith.constant 0 : i32
    %c0_i32_0 = arith.constant 0 : i32
    %c0_i32_1 = arith.constant 0 : i32
    return %c0_i32, %c0_i32_0 : i32, i32
  }
}

</mosaic_0001>

<llo_original>
// kernel: neural_reward_model.1
$region0: #{neural_reward_model.1}
  #allocation0 [shape = 'u32[]', space=smem, size = 0x4, offset = 0x4, fixed_abs, tag = 'smem constant byte address 0x4 - core index']
  #allocation1 [shape = 'u32[144,128]{1,0:T(1,128)}', space=vmem, size = 0x12000, scoped, tag = 'internal scratch']
  %s0 = inlined_call_operand.vmem [shape: f32[16,32], index: 0, kind: input, shape index: {}]
  %s1 = inlined_call_operand.vmem [shape: bf16[192,128], index: 1, kind: input, shape index: {}]
  %s2 = inlined_call_operand.vmem [shape: f32[32,128], index: 2, kind: input, shape index: {}]
  %s3 = inlined_call_operand.vmem [shape: f32[16,128], index: 3, kind: output, shape index: {}]
  %s4 = sld [smem:[#allocation0]]
  $region22: #{neural_reward_model.1} parent=0
    _
  %s6 = ssub.s32 1, %s4
  %s7 = scalar_select 0, %s6, %s4
  // Predicated region
  $region2: #{neural_reward_model.1} parent=0 // pred_check
    _
  $region3: #{neural_reward_model.1} parent=0 // pred_check_branch
    %9 = sbr.rel (0) target = $region5
  $region4: #{neural_reward_model.1} parent=0 // pred_region
    _
  $region5: #{neural_reward_model.1} parent=0 // pred_fallthru
    _
  // Predicated region
  $region6: #{neural_reward_model.1} parent=0 // pred_check
    _
  $region7: #{neural_reward_model.1} parent=0 // pred_check_branch
    %11 = sbr.rel (0) target = $region9
  $region8: #{neural_reward_model.1} parent=0 // pred_region
    _
  $region9: #{neural_reward_model.1} parent=0 // pred_fallthru
    _
  // Predicated region
  $region10: #{neural_reward_model.1} parent=0 // pred_check
    _
  $region11: #{neural_reward_model.1} parent=0 // pred_check_branch
    %13 = sbr.rel (0) target = $region13
  $region12: #{neural_reward_model.1} parent=0 // pred_region
    _
  $region13: #{neural_reward_model.1} parent=0 // pred_fallthru
    _
  %v15 = vld [vmem:[%s0] sm:$0xff]
  %v16 = vld [vmem:[%s0 + $0x8] sm:$0xff]
  %v17 = vld [vmem:[%s1] sm:$0xf]
  %v18 = vld [vmem:[%s1 + $0x4] sm:$0xf]
  %v19 = vld [vmem:[%s1 + $0x8] sm:$0xf]
  %v20 = vld [vmem:[%s1 + $0xc] sm:$0xf]
  %v21 = vld [vmem:[%s1 + $0x10] sm:$0xf]
  %v22 = vld [vmem:[%s1 + $0x14] sm:$0xf]
  %v23 = vld [vmem:[%s1 + $0x18] sm:$0xf]
  %v24 = vld [vmem:[%s1 + $0x1c] sm:$0xf]
  %v25 = vld [vmem:[%s1 + $0x20] sm:$0xf]
  %v26 = vld [vmem:[%s1 + $0x24] sm:$0xf]
  %v27 = vld [vmem:[%s1 + $0x28] sm:$0xf]
  %v28 = vld [vmem:[%s1 + $0x2c] sm:$0xf]
  %v29 = vld [vmem:[%s1 + $0x30] sm:$0xf]
  %v30 = vld [vmem:[%s1 + $0x34] sm:$0xf]
  %v31 = vld [vmem:[%s1 + $0x38] sm:$0xf]
  %v32 = vld [vmem:[%s1 + $0x3c] sm:$0xf]
  %v33 = vld [vmem:[%s1 + $0x40] sm:$0xf]
  %v34 = vld [vmem:[%s1 + $0x44] sm:$0xf]
  %v35 = vld [vmem:[%s1 + $0x48] sm:$0xf]
  %v36 = vld [vmem:[%s1 + $0x4c] sm:$0xf]
  %v37 = vld [vmem:[%s1 + $0x50] sm:$0xf]
  %v38 = vld [vmem:[%s1 + $0x54] sm:$0xf]
  %v39 = vld [vmem:[%s1 + $0x58] sm:$0xf]
  %v40 = vld [vmem:[%s1 + $0x5c] sm:$0xf]
  %v41 = vld [vmem:[%s2] sm:$0xff]
  %v42 = vld [vmem:[%s2 + $0x8] sm:$0xff]
  %v43 = vld [vmem:[%s2 + $0x10] sm:$0xff]
  %v44 = vld [vmem:[%s2 + $0x18] sm:$0xff]
  %v45 = vpack.c.bf16 %v16, %v15
  %v46 = vlaneseq
  %v47 = vshrl.u32 %v46, 7
  %v48 = vsub.s32 0, %v47
  %v49 = vrot.slane %v41, %v48
  %v54 = vunpack.c.l.b16 %v17
  %v55 = vunpack.c.l.b16 %v18
  %v56 = vunpack.c.l.b16 %v19
  %v57 = vunpack.c.l.b16 %v20
  %v58 = vpack.c.b16 %v55, %v54
  %v59 = vpack.c.b16 %v57, %v56
  %vm62 = vcmask 261120
  %v64 = vsel %vm62, %v45, 0
  %66 = vmatprep.subr.bf16.mxu0 0
  %67 = vmatpush1.bf16.msra.mxu0 %v58
  %68 = vmatprep.subr.bf16.mxu0 0
  %69 = vmatpush1.bf16.msra.mxu0 %v59
  %70 = vmatprep.subr.bf16.mxu0 0
  %71 = vmatpush1.bf16.msra.mxu0 0
  %72 = vmatprep.subr.bf16.mxu0 0
  %73 = vmatpush1.bf16.msra.mxu0 0
  %74 = vmatprep.subr.bf16.mxu0 0
  %75 = vmatpush1.bf16.msra.mxu0 0
  %76 = vmatprep.subr.bf16.mxu0 0
  %77 = vmatpush1.bf16.msra.mxu0 0
  %78 = vmatprep.subr.bf16.mxu0 0
  %79 = vmatpush1.bf16.msra.mxu0 0
  %80 = vmatprep.subr.bf16.mxu0 0
  %81 = vmatpush1.bf16.msra.mxu0 0
  %82 = vmatprep.subr.bf16.mxu0 0
  %83 = vmatpush1.bf16.msra.mxu0 0
  %84 = vmatprep.subr.bf16.mxu0 0
  %85 = vmatpush1.bf16.msra.mxu0 0
  %86 = vmatprep.subr.bf16.mxu0 0
  %87 = vmatpush1.bf16.msra.mxu0 0
  %88 = vmatprep.subr.bf16.mxu0 0
  %89 = vmatpush1.bf16.msra.mxu0 0
  %90 = vmatprep.subr.bf16.mxu0 0
  %91 = vmatpush1.bf16.msra.mxu0 0
  %92 = vmatprep.subr.bf16.mxu0 0
  %93 = vmatpush1.bf16.msra.mxu0 0
  %94 = vmatprep.subr.bf16.mxu0 0
  %95 = vmatpush1.bf16.msra.mxu0 0
  %96 = vmatprep.subr.bf16.mxu0 0
  %97 = vmatpush1.bf16.msra.mxu0 0
  %98 = vmatprep.mubr.bf16.mxu0 0
  %99 = vmatmul.mubr.bf16.gmra.mrb[0].mxu0 %v64
  %v100 = vpop.f32.mrb[0].mxu0
  %v101 = vadd.f32 %v49, %v100
  %v102 = vpop.f32.mrb[0].mxu0
  %v103 = vpop.f32.mrb[0].mxu0
  %v104 = vadd.f32 %v49, %v103
  %v105 = vpop.f32.mrb[0].mxu0
  %106 = vdwg.mxu0
  %109 = vrot.lane.b32.xlu0 %v101, 96
  %v110 = vpop.permute.xlu0 %109
  %111 = vrot.lane.b32.xlu0 %v104, 96
  %v112 = vpop.permute.xlu0 %111
  %v113 = vsel %vm62, %v101, 0
  %v115 = vsel %vm62, %v104, 0
  %v117 = vsel %vm62, %v110, 0
  %v119 = vsel %vm62, %v112, 0
  %121 = vmatprep.subr.mxu0 0.0
  %122 = vmatpush1.xpose.msra.mxu0 %v117
  %123 = vmatprep.subr.mxu0 0.0
  %124 = vmatpush1.xpose.msra.mxu0 %v119
  %125 = vmatprep.subr.mxu0 0.0
  %126 = vmatpush1.xpose.msra.mxu0 0.0
  %127 = vmatprep.subr.mxu0 0.0
  %128 = vmatpush1.xpose.msra.mxu0 0.0
  %129 = vmatprep.subr.mxu0 0.0
  %130 = vmatpush1.xpose.msra.mxu0 0.0
  %131 = vmatprep.subr.mxu0 0.0
  %132 = vmatpush1.xpose.msra.mxu0 0.0
  %133 = vmatprep.subr.mxu0 0.0
  %134 = vmatpush1.xpose.msra.mxu0 0.0
  %135 = vmatprep.subr.mxu0 0.0
  %136 = vmatpush1.xpose.msra.mxu0 0.0
  %137 = vmatprep.subr.mxu0 0.0
  %138 = vmatpush1.xpose.msra.mxu0 0.0
  %139 = vmatprep.subr.mxu0 0.0
  %140 = vmatpush1.xpose.msra.mxu0 0.0
  %141 = vmatprep.subr.mxu0 0.0
  %142 = vmatpush1.xpose.msra.mxu0 0.0
  %143 = vmatprep.subr.mxu0 0.0
  %144 = vmatpush1.xpose.msra.mxu0 0.0
  %145 = vmatprep.subr.mxu0 0.0
  %146 = vmatpush1.xpose.msra.mxu0 0.0
  %147 = vmatprep.subr.mxu0 0.0
  %148 = vmatpush1.xpose.msra.mxu0 0.0
  %149 = vmatprep.subr.mxu0 0.0
  %150 = vmatpush1.xpose.msra.mxu0 0.0
  %151 = vmatprep.subr.mxu0 0.0
  %152 = vmatpush1.xpose.msra.mxu0 0.0
  %153 = vmatprep.subr.mxu0 0.0
  %154 = vmatpush1.xpose.msra.mxu0 0.0
  %155 = vmatprep.subr.mxu0 0.0
  %156 = vmatpush1.xpose.msra.mxu0 0.0
  %157 = vmatprep.subr.mxu0 0.0
  %158 = vmatpush1.xpose.msra.mxu0 0.0
  %159 = vmatprep.subr.mxu0 0.0
  %160 = vmatpush1.xpose.msra.mxu0 0.0
  %161 = vmatprep.subr.mxu0 0.0
  %162 = vmatpush1.xpose.msra.mxu0 0.0
  %163 = vmatprep.subr.mxu0 0.0
  %164 = vmatpush1.xpose.msra.mxu0 0.0
  %165 = vmatprep.subr.mxu0 0.0
  %166 = vmatpush1.xpose.msra.mxu0 0.0
  %167 = vmatprep.subr.mxu0 0.0
  %168 = vmatpush1.xpose.msra.mxu0 0.0
  %169 = vmatprep.subr.mxu0 0.0
  %170 = vmatpush1.xpose.msra.mxu0 0.0
  %171 = vmatprep.subr.mxu0 0.0
  %172 = vmatpush1.xpose.msra.mxu0 0.0
  %173 = vmatprep.subr.mxu0 0.0
  %174 = vmatpush1.xpose.msra.mxu0 0.0
  %175 = vmatprep.subr.mxu0 0.0
  %176 = vmatpush1.xpose.msra.mxu0 0.0
  %177 = vmatprep.subr.mxu0 0.0
  %178 = vmatpush1.xpose.msra.mxu0 0.0
  %179 = vmatprep.subr.mxu0 0.0
  %180 = vmatpush1.xpose.msra.mxu0 0.0
  %181 = vmatprep.subr.mxu0 0.0
  %182 = vmatpush1.xpose.msra.mxu0 0.0
  %183 = vmatprep.subr.mxu0 0.0
  %184 = vmatpush1.xpose.msra.mxu0 0.0
  %185 = vmatprep.mubr.f32.mxu0 0.0
  %186 = vmatmul.mubr.f32.gmra.mrb[0].mxu0 %v113
  %v187 = vpop.f32.mrb[0].mxu0
  %v188 = vadd.f32 0.0, %v187
  %v189 = vpop.f32.mrb[0].mxu0
  %190 = vmatprep.mubr.f32.mxu0 0.0
  %191 = vmatmul.mubr.f32.gmra.mrb[0].mxu0 %v115
  %v192 = vpop.f32.mrb[0].mxu0
  %v193 = vadd.f32 0.0, %v192
  %v194 = vpop.f32.mrb[0].mxu0
  %195 = vdwg.mxu0
  %v196 = vmul.f32 %v188, 0.17677669
  %v197 = vmul.f32 %v193, 0.17677669
  %v198 = vadd.f32 %v196, %v43
  %v199 = vadd.f32 %v197, %v44
  %vm200 = vcmask 130048
  %v201 = vsel %vm200, %v198, -inf
  %202 = vmax.xlane.f32.xlu0 %v201
  %v203 = vpop.xlane.xlu0 %202
  %v204 = vsel %vm200, %v199, -inf
  %205 = vmax.xlane.f32.xlu0 %v204
  %v206 = vpop.xlane.xlu0 %205
  %v207 = vsub.f32 %v198, %v203
  %v208 = vsub.f32 %v199, %v206
  %v209 = vmul.f32 %v207, 1.442695
  %v210 = vpow.pop %v209
  %v211 = vmul.f32 %v208, 1.442695
  %v212 = vpow.pop %v211
  %v213 = vsel %vm200, %v210, 0.0
  %214 = vadd.xlane.f32.xlu0 %v213
  %v215 = vpop.xlane.xlu0 %214
  %v216 = vsel %vm200, %v212, 0.0
  %217 = vadd.xlane.f32.xlu0 %v216
  %v218 = vpop.xlane.xlu0 %217
  %v219 = vrcp.pop %v215
  %v220 = vrcp.pop %v218
  %v221 = vmul.f32 %v210, %v219
  %v222 = vmul.f32 %v212, %v220
  %223 = vrot.lane.b32.xlu0 %v101, 64
  %v224 = vpop.permute.xlu0 %223
  %225 = vrot.lane.b32.xlu0 %v104, 64
  %v226 = vpop.permute.xlu0 %225
  %v230 = vsel %vm200, %v221, 0
  %v233 = vsel %vm200, %v222, 0
  %235 = vmatprep.subr.mxu0 0.0
  %236 = vmatpush1.msra.mxu0 %v224
  %237 = vmatprep.subr.mxu0 0.0
  %238 = vmatpush1.msra.mxu0 %v226
  %239 = vmatprep.subr.mxu0 0.0
  %240 = vmatpush1.msra.mxu0 0.0
  %241 = vmatprep.subr.mxu0 0.0
  %242 = vmatpush1.msra.mxu0 0.0
  %243 = vmatprep.subr.mxu0 0.0
  %244 = vmatpush1.msra.mxu0 0.0
  %245 = vmatprep.subr.mxu0 0.0
  %246 = vmatpush1.msra.mxu0 0.0
  %247 = vmatprep.subr.mxu0 0.0
  %248 = vmatpush1.msra.mxu0 0.0
  %249 = vmatprep.subr.mxu0 0.0
  %250 = vmatpush1.msra.mxu0 0.0
  %251 = vmatprep.subr.mxu0 0.0
  %252 = vmatpush1.msra.mxu0 0.0
  %253 = vmatprep.subr.mxu0 0.0
  %254 = vmatpush1.msra.mxu0 0.0
  %255 = vmatprep.subr.mxu0 0.0
  %256 = vmatpush1.msra.mxu0 0.0
  %257 = vmatprep.subr.mxu0 0.0
  %258 = vmatpush1.msra.mxu0 0.0
  %259 = vmatprep.subr.mxu0 0.0
  %260 = vmatpush1.msra.mxu0 0.0
  %261 = vmatprep.subr.mxu0 0.0
  %262 = vmatpush1.msra.mxu0 0.0
  %263 = vmatprep.subr.mxu0 0.0
  %264 = vmatpush1.msra.mxu0 0.0
  %265 = vmatprep.subr.mxu0 0.0
  %266 = vmatpush1.msra.mxu0 0.0
  %267 = vmatprep.subr.mxu0 0.0
  %268 = vmatpush1.msra.mxu0 0.0
  %269 = vmatprep.subr.mxu0 0.0
  %270 = vmatpush1.msra.mxu0 0.0
  %271 = vmatprep.subr.mxu0 0.0
  %272 = vmatpush1.msra.mxu0 0.0
  %273 = vmatprep.subr.mxu0 0.0
  %274 = vmatpush1.msra.mxu0 0.0
  %275 = vmatprep.subr.mxu0 0.0
  %276 = vmatpush1.msra.mxu0 0.0
  %277 = vmatprep.subr.mxu0 0.0
  %278 = vmatpush1.msra.mxu0 0.0
  %279 = vmatprep.subr.mxu0 0.0
  %280 = vmatpush1.msra.mxu0 0.0
  %281 = vmatprep.subr.mxu0 0.0
  %282 = vmatpush1.msra.mxu0 0.0
  %283 = vmatprep.subr.mxu0 0.0
  %284 = vmatpush1.msra.mxu0 0.0
  %285 = vmatprep.subr.mxu0 0.0
  %286 = vmatpush1.msra.mxu0 0.0
  %287 = vmatprep.subr.mxu0 0.0
  %288 = vmatpush1.msra.mxu0 0.0
  %289 = vmatprep.subr.mxu0 0.0
  %290 = vmatpush1.msra.mxu0 0.0
  %291 = vmatprep.subr.mxu0 0.0
  %292 = vmatpush1.msra.mxu0 0.0
  %293 = vmatprep.subr.mxu0 0.0
  %294 = vmatpush1.msra.mxu0 0.0
  %295 = vmatprep.subr.mxu0 0.0
  %296 = vmatpush1.msra.mxu0 0.0
  %297 = vmatprep.subr.mxu0 0.0
  %298 = vmatpush1.msra.mxu0 0.0
  %299 = vmatprep.mubr.f32.mxu0 0.0
  %300 = vmatmul.mubr.f32.gmra.mrb[0].mxu0 %v230
  %v301 = vpop.f32.mrb[0].mxu0
  %v302 = vadd.f32 0.0, %v301
  %v303 = vpop.f32.mrb[0].mxu0
  %304 = vmatprep.mubr.f32.mxu0 0.0
  %305 = vmatmul.mubr.f32.gmra.mrb[0].mxu0 %v233
  %v306 = vpop.f32.mrb[0].mxu0
  %v307 = vadd.f32 0.0, %v306
  %v308 = vpop.f32.mrb[0].mxu0
  %309 = vdwg.mxu0
  %v310 = vpack.c.bf16 %v307, %v302
  %v315 = vunpack.c.l.b16 %v21
  %v316 = vunpack.c.l.b16 %v22
  %v317 = vunpack.c.l.b16 %v23
  %v318 = vunpack.c.l.b16 %v24
  %v319 = vpack.c.b16 %v316, %v315
  %v320 = vpack.c.b16 %v318, %v317
  %v324 = vsel %vm62, %v310, 0
  %326 = vmatprep.subr.bf16.mxu0 0
  %327 = vmatpush1.bf16.msra.mxu0 %v319
  %328 = vmatprep.subr.bf16.mxu0 0
  %329 = vmatpush1.bf16.msra.mxu0 %v320
  %330 = vmatprep.subr.bf16.mxu0 0
  %331 = vmatpush1.bf16.msra.mxu0 0
  %332 = vmatprep.subr.bf16.mxu0 0
  %333 = vmatpush1.bf16.msra.mxu0 0
  %334 = vmatprep.subr.bf16.mxu0 0
  %335 = vmatpush1.bf16.msra.mxu0 0
  %336 = vmatprep.subr.bf16.mxu0 0
  %337 = vmatpush1.bf16.msra.mxu0 0
  %338 = vmatprep.subr.bf16.mxu0 0
  %339 = vmatpush1.bf16.msra.mxu0 0
  %340 = vmatprep.subr.bf16.mxu0 0
  %341 = vmatpush1.bf16.msra.mxu0 0
  %342 = vmatprep.subr.bf16.mxu0 0
  %343 = vmatpush1.bf16.msra.mxu0 0
  %344 = vmatprep.subr.bf16.mxu0 0
  %345 = vmatpush1.bf16.msra.mxu0 0
  %346 = vmatprep.subr.bf16.mxu0 0
  %347 = vmatpush1.bf16.msra.mxu0 0
  %348 = vmatprep.subr.bf16.mxu0 0
  %349 = vmatpush1.bf16.msra.mxu0 0
  %350 = vmatprep.subr.bf16.mxu0 0
  %351 = vmatpush1.bf16.msra.mxu0 0
  %352 = vmatprep.subr.bf16.mxu0 0
  %353 = vmatpush1.bf16.msra.mxu0 0
  %354 = vmatprep.subr.bf16.mxu0 0
  %355 = vmatpush1.bf16.msra.mxu0 0
  %356 = vmatprep.subr.bf16.mxu0 0
  %357 = vmatpush1.bf16.msra.mxu0 0
  %358 = vmatprep.mubr.bf16.mxu0 0
  %359 = vmatmul.mubr.bf16.gmra.mrb[0].mxu0 %v324
  %v360 = vpop.f32.mrb[0].mxu0
  %v361 = vadd.f32 0.0, %v360
  %v362 = vpop.f32.mrb[0].mxu0
  %v363 = vpop.f32.mrb[0].mxu0
  %v364 = vadd.f32 0.0, %v363
  %v365 = vpop.f32.mrb[0].mxu0
  %366 = vdwg.mxu0
  %v367 = vadd.f32 %v15, %v361
  %v368 = vadd.f32 %v16, %v364
  %v369 = vlaneseq
  %v370 = vshrl.u32 %v369, 7
  %v371 = vsub.s32 1, %v370
  %v372 = vrot.slane %v41, %v371
  %v373 = vadd.f32 %v367, %v372
  %v374 = vadd.f32 %v368, %v372
  %v375 = vsel %vm62, %v373, 0.0
  %376 = vadd.xlane.f32.xlu0 %v375
  %v377 = vpop.xlane.xlu0 %376
  %v378 = vsel %vm62, %v374, 0.0
  %379 = vadd.xlane.f32.xlu0 %v378
  %v380 = vpop.xlane.xlu0 %379
  %v381 = vrcp.pop 32.0
  %v382 = vmul.f32 %v377, %v381
  %v383 = vmul.f32 %v380, %v381
  %v384 = vsub.f32 %v373, %v382
  %v385 = vsub.f32 %v374, %v383
  %v386 = vmul.f32 %v384, %v384
  %v387 = vmul.f32 %v385, %v385
  %v388 = vsel %vm62, %v386, 0.0
  %389 = vadd.xlane.f32.xlu0 %v388
  %v390 = vpop.xlane.xlu0 %389
  %v391 = vsel %vm62, %v387, 0.0
  %392 = vadd.xlane.f32.xlu0 %v391
  %v393 = vpop.xlane.xlu0 %392
  %v394 = vmul.f32 %v390, %v381
  %v395 = vmul.f32 %v393, %v381
  %v396 = vadd.f32 %v394, 1e-07
  %v397 = vadd.f32 %v395, 1e-07
  %v398 = vrsqrt.pop %v396
  %v399 = vrsqrt.pop %v397
  %v400 = vmul.f32 %v384, %v398
  %v401 = vmul.f32 %v385, %v399
  %v402 = vlaneseq
  %v403 = vshrl.u32 %v402, 7
  %v404 = vsub.s32 2, %v403
  %v405 = vrot.slane %v41, %v404
  %v406 = vmul.f32 %v400, %v405
  %v407 = vmul.f32 %v401, %v405
  %v408 = vlaneseq
  %v409 = vshrl.u32 %v408, 7
  %v410 = vsub.s32 3, %v409
  %v411 = vrot.slane %v41, %v410
  %v412 = vadd.f32 %v406, %v411
  %v413 = vadd.f32 %v407, %v411
  %v414 = vpack.c.bf16 %v413, %v412
  %v415 = vlaneseq
  %v416 = vshrl.u32 %v415, 7
  %v417 = vsub.s32 4, %v416
  %v418 = vrot.slane %v41, %v417
  %v423 = vunpack.c.l.b16 %v25
  %v424 = vunpack.c.l.b16 %v26
  %v425 = vunpack.c.l.b16 %v27
  %v426 = vunpack.c.l.b16 %v28
  %v427 = vpack.c.b16 %v424, %v423
  %v428 = vpack.c.b16 %v426, %v425
  %v432 = vsel %vm62, %v414, 0
  %434 = vmatprep.subr.bf16.mxu0 0
  %435 = vmatpush1.bf16.msra.mxu0 %v427
  %436 = vmatprep.subr.bf16.mxu0 0
  %437 = vmatpush1.bf16.msra.mxu0 %v428
  %438 = vmatprep.subr.bf16.mxu0 0
  %439 = vmatpush1.bf16.msra.mxu0 0
  %440 = vmatprep.subr.bf16.mxu0 0
  %441 = vmatpush1.bf16.msra.mxu0 0
  %442 = vmatprep.subr.bf16.mxu0 0
  %443 = vmatpush1.bf16.msra.mxu0 0
  %444 = vmatprep.subr.bf16.mxu0 0
  %445 = vmatpush1.bf16.msra.mxu0 0
  %446 = vmatprep.subr.bf16.mxu0 0
  %447 = vmatpush1.bf16.msra.mxu0 0
  %448 = vmatprep.subr.bf16.mxu0 0
  %449 = vmatpush1.bf16.msra.mxu0 0
  %450 = vmatprep.subr.bf16.mxu0 0
  %451 = vmatpush1.bf16.msra.mxu0 0
  %452 = vmatprep.subr.bf16.mxu0 0
  %453 = vmatpush1.bf16.msra.mxu0 0
  %454 = vmatprep.subr.bf16.mxu0 0
  %455 = vmatpush1.bf16.msra.mxu0 0
  %456 = vmatprep.subr.bf16.mxu0 0
  %457 = vmatpush1.bf16.msra.mxu0 0
  %458 = vmatprep.subr.bf16.mxu0 0
  %459 = vmatpush1.bf16.msra.mxu0 0
  %460 = vmatprep.subr.bf16.mxu0 0
  %461 = vmatpush1.bf16.msra.mxu0 0
  %462 = vmatprep.subr.bf16.mxu0 0
  %463 = vmatpush1.bf16.msra.mxu0 0
  %464 = vmatprep.subr.bf16.mxu0 0
  %465 = vmatpush1.bf16.msra.mxu0 0
  %466 = vmatprep.mubr.bf16.mxu0 0
  %467 = vmatmul.mubr.bf16.gmra.mrb[0].mxu0 %v432
  %v468 = vpop.f32.mrb[0].mxu0
  %v469 = vadd.f32 %v418, %v468
  %v470 = vpop.f32.mrb[0].mxu0
  %v471 = vpop.f32.mrb[0].mxu0
  %v472 = vadd.f32 %v418, %v471
  %v473 = vpop.f32.mrb[0].mxu0
  %474 = vdwg.mxu0
  %v475 = vmul.f32 %v469, 0.5
  %v476 = vmul.f32 %v472, 0.5
  %v477 = vmul.f32 %v469, 0.044715
  %v478 = vmul.f32 %v472, 0.044715
  %v479 = vmul.f32 %v477, %v469
  %v480 = vmul.f32 %v478, %v472
  %v481 = vmul.f32 %v479, %v469
  %v482 = vmul.f32 %v480, %v472
  %v483 = vadd.f32 %v469, %v481
  %v484 = vadd.f32 %v472, %v482
  %v485 = vmul.f32 %v483, 0.7978846
  %v486 = vmul.f32 %v484, 0.7978846
  %v487 = vtanh.pop %v485
  %v488 = vtanh.pop %v486
  %v489 = vadd.f32 %v487, 1.0
  %v490 = vadd.f32 %v488, 1.0
  %v491 = vmul.f32 %v475, %v489
  %v492 = vmul.f32 %v476, %v490
  %v493 = vpack.c.bf16 %v492, %v491
  %v502 = vunpack.c.l.b16 %v33
  %v503 = vunpack.c.l.b16 %v34
  %v504 = vunpack.c.l.b16 %v35
  %v505 = vunpack.c.l.b16 %v36
  %v506 = vunpack.c.l.b16 %v37
  %v507 = vunpack.c.l.b16 %v38
  %v508 = vunpack.c.l.b16 %v39
  %v509 = vunpack.c.l.b16 %v40
  %v510 = vpack.c.b16 %v503, %v502
  %v511 = vpack.c.b16 %v505, %v504
  %v512 = vpack.c.b16 %v507, %v506
  %v513 = vpack.c.b16 %v509, %v508
  %vm518 = vcmask 523264
  %v520 = vsel %vm518, %v493, 0
  %522 = vmatprep.subr.bf16.mxu0 0
  %523 = vmatpush1.bf16.msra.mxu0 %v510
  %524 = vmatprep.subr.bf16.mxu0 0
  %525 = vmatpush1.bf16.msra.mxu0 %v511
  %526 = vmatprep.subr.bf16.mxu0 0
  %527 = vmatpush1.bf16.msra.mxu0 %v512
  %528 = vmatprep.subr.bf16.mxu0 0
  %529 = vmatpush1.bf16.msra.mxu0 %v513
  %530 = vmatprep.subr.bf16.mxu0 0
  %531 = vmatpush1.bf16.msra.mxu0 0
  %532 = vmatprep.subr.bf16.mxu0 0
  %533 = vmatpush1.bf16.msra.mxu0 0
  %534 = vmatprep.subr.bf16.mxu0 0
  %535 = vmatpush1.bf16.msra.mxu0 0
  %536 = vmatprep.subr.bf16.mxu0 0
  %537 = vmatpush1.bf16.msra.mxu0 0
  %538 = vmatprep.subr.bf16.mxu0 0
  %539 = vmatpush1.bf16.msra.mxu0 0
  %540 = vmatprep.subr.bf16.mxu0 0
  %541 = vmatpush1.bf16.msra.mxu0 0
  %542 = vmatprep.subr.bf16.mxu0 0
  %543 = vmatpush1.bf16.msra.mxu0 0
  %544 = vmatprep.subr.bf16.mxu0 0
  %545 = vmatpush1.bf16.msra.mxu0 0
  %546 = vmatprep.subr.bf16.mxu0 0
  %547 = vmatpush1.bf16.msra.mxu0 0
  %548 = vmatprep.subr.bf16.mxu0 0
  %549 = vmatpush1.bf16.msra.mxu0 0
  %550 = vmatprep.subr.bf16.mxu0 0
  %551 = vmatpush1.bf16.msra.mxu0 0
  %552 = vmatprep.subr.bf16.mxu0 0
  %553 = vmatpush1.bf16.msra.mxu0 0
  %554 = vmatprep.mubr.bf16.mxu0 0
  %555 = vmatmul.mubr.bf16.gmra.mrb[0].mxu0 %v520
  %v556 = vpop.f32.mrb[0].mxu0
  %v557 = vadd.f32 0.0, %v556
  %v558 = vpop.f32.mrb[0].mxu0
  %v559 = vpop.f32.mrb[0].mxu0
  %v560 = vadd.f32 0.0, %v559
  %v561 = vpop.f32.mrb[0].mxu0
  %562 = vdwg.mxu0
  %v563 = vadd.f32 %v412, %v557
  %v564 = vadd.f32 %v413, %v560
  %v565 = vlaneseq
  %v566 = vshrl.u32 %v565, 7
  %v567 = vsub.s32 5, %v566
  %v568 = vrot.slane %v41, %v567
  %v569 = vadd.f32 %v563, %v568
  %v570 = vadd.f32 %v564, %v568
  %v571 = vsel %vm62, %v569, 0.0
  %572 = vadd.xlane.f32.xlu0 %v571
  %v573 = vpop.xlane.xlu0 %572
  %v574 = vsel %vm62, %v570, 0.0
  %575 = vadd.xlane.f32.xlu0 %v574
  %v576 = vpop.xlane.xlu0 %575
  %v577 = vmul.f32 %v573, %v381
  %v578 = vmul.f32 %v576, %v381
  %v579 = vsub.f32 %v569, %v577
  %v580 = vsub.f32 %v570, %v578
  %v581 = vmul.f32 %v579, %v579
  %v582 = vmul.f32 %v580, %v580
  %v583 = vsel %vm62, %v581, 0.0
  %584 = vadd.xlane.f32.xlu0 %v583
  %v585 = vpop.xlane.xlu0 %584
  %v586 = vsel %vm62, %v582, 0.0
  %587 = vadd.xlane.f32.xlu0 %v586
  %v588 = vpop.xlane.xlu0 %587
  %v589 = vmul.f32 %v585, %v381
  %v590 = vmul.f32 %v588, %v381
  %v591 = vadd.f32 %v589, 1e-07
  %v592 = vadd.f32 %v590, 1e-07
  %v593 = vrsqrt.pop %v591
  %v594 = vrsqrt.pop %v592
  %v595 = vmul.f32 %v579, %v593
  %v596 = vmul.f32 %v580, %v594
  %v597 = vlaneseq
  %v598 = vshrl.u32 %v597, 7
  %v599 = vsub.s32 6, %v598
  %v600 = vrot.slane %v41, %v599
  %v601 = vmul.f32 %v595, %v600
  %v602 = vmul.f32 %v596, %v600
  %v603 = vlaneseq
  %v604 = vshrl.u32 %v603, 7
  %v605 = vsub.s32 7, %v604
  %v606 = vrot.slane %v41, %v605
  %v607 = vadd.f32 %v601, %v606
  %v608 = vadd.f32 %v602, %v606
  %v609 = vpack.c.bf16 %v608, %v607
  %v610 = vlaneseq
  %v611 = vshrl.u32 %v610, 7
  %v612 = vsub.s32 0, %v611
  %v613 = vrot.slane %v42, %v612
  %v618 = vunpack.c.l.b16 %v29
  %v619 = vunpack.c.l.b16 %v30
  %v620 = vunpack.c.l.b16 %v31
  %v621 = vunpack.c.l.b16 %v32
  %v622 = vpack.c.b16 %v619, %v618
  %v623 = vpack.c.b16 %v621, %v620
  %v627 = vsel %vm62, %v609, 0
  %629 = vmatprep.subr.bf16.mxu0 0
  %630 = vmatpush1.bf16.msra.mxu0 %v622
  %631 = vmatprep.subr.bf16.mxu0 0
  %632 = vmatpush1.bf16.msra.mxu0 %v623
  %633 = vmatprep.subr.bf16.mxu0 0
  %634 = vmatpush1.bf16.msra.mxu0 0
  %635 = vmatprep.subr.bf16.mxu0 0
  %636 = vmatpush1.bf16.msra.mxu0 0
  %637 = vmatprep.subr.bf16.mxu0 0
  %638 = vmatpush1.bf16.msra.mxu0 0
  %639 = vmatprep.subr.bf16.mxu0 0
  %640 = vmatpush1.bf16.msra.mxu0 0
  %641 = vmatprep.subr.bf16.mxu0 0
  %642 = vmatpush1.bf16.msra.mxu0 0
  %643 = vmatprep.subr.bf16.mxu0 0
  %644 = vmatpush1.bf16.msra.mxu0 0
  %645 = vmatprep.subr.bf16.mxu0 0
  %646 = vmatpush1.bf16.msra.mxu0 0
  %647 = vmatprep.subr.bf16.mxu0 0
  %648 = vmatpush1.bf16.msra.mxu0 0
  %649 = vmatprep.subr.bf16.mxu0 0
  %650 = vmatpush1.bf16.msra.mxu0 0
  %651 = vmatprep.subr.bf16.mxu0 0
  %652 = vmatpush1.bf16.msra.mxu0 0
  %653 = vmatprep.subr.bf16.mxu0 0
  %654 = vmatpush1.bf16.msra.mxu0 0
  %655 = vmatprep.subr.bf16.mxu0 0
  %656 = vmatpush1.bf16.msra.mxu0 0
  %657 = vmatprep.subr.bf16.mxu0 0
  %658 = vmatpush1.bf16.msra.mxu0 0
  %659 = vmatprep.subr.bf16.mxu0 0
  %660 = vmatpush1.bf16.msra.mxu0 0
  %661 = vmatprep.mubr.bf16.mxu0 0
  %662 = vmatmul.mubr.bf16.gmra.mrb[0].mxu0 %v627
  %v663 = vpop.f32.mrb[0].mxu0
  %v664 = vadd.f32 %v613, %v663
  %v665 = vpop.f32.mrb[0].mxu0
  %v666 = vpop.f32.mrb[0].mxu0
  %v667 = vadd.f32 %v613, %v666
  %v668 = vpop.f32.mrb[0].mxu0
  %669 = vdwg.mxu0
  %v670 = vmul.f32 %v664, 0.5
  %v671 = vmul.f32 %v667, 0.5
  %v672 = vmul.f32 %v664, 0.044715
  %v673 = vmul.f32 %v667, 0.044715
  %v674 = vmul.f32 %v672, %v664
  %v675 = vmul.f32 %v673, %v667
  %v676 = vmul.f32 %v674, %v664
  %v677 = vmul.f32 %v675, %v667
  %v678 = vadd.f32 %v664, %v676
  %v679 = vadd.f32 %v667, %v677
  %v680 = vmul.f32 %v678, 0.7978846
  %v681 = vmul.f32 %v679, 0.7978846
  %v682 = vtanh.pop %v680
  %v683 = vtanh.pop %v681
  %v684 = vadd.f32 %v682, 1.0
  %v685 = vadd.f32 %v683, 1.0
  %v686 = vmul.f32 %v670, %v684
  %v687 = vmul.f32 %v671, %v685
  %v688 = vlaneseq
  %v689 = vshrl.u32 %v688, 7
  %v690 = vsub.s32 2, %v689
  %v691 = vrot.slane %v42, %v690
  %v692 = vmul.f32 %v686, %v691
  %v693 = vmul.f32 %v687, %v691
  %v694 = vsel %vm200, %v692, 0.0
  %695 = vadd.xlane.f32.xlu0 %v694
  %v696 = vpop.xlane.xlu0 %695
  %v697 = vsel %vm200, %v693, 0.0
  %698 = vadd.xlane.f32.xlu0 %v697
  %v699 = vpop.xlane.xlu0 %698
  %v700 = vlaneseq
  %v701 = vshrl.u32 %v700, 7
  %v702 = vsub.s32 1, %v701
  %v703 = vrot.slane %v42, %v702
  %v704 = vadd.f32 %v696, %v703
  %v705 = vadd.f32 %v699, %v703
  %v706 = vmul.f32 %v704, 0.33333334
  %v707 = vmul.f32 %v705, 0.33333334
  %v708 = vtanh.pop %v706
  %v709 = vtanh.pop %v707
  %v710 = vmul.f32 %v708, 3.0
  %v711 = vmul.f32 %v709, 3.0
  %713 = vset.pattern.permute.xlu0 0
  %714 = vperm.xlu0 %713, %v710
  %v715 = vpop.permute.xlu0 %714
  %718 = vset.pattern.permute.xlu0 0
  %719 = vperm.xlu0 %718, %v711
  %v720 = vpop.permute.xlu0 %719
  %722 = vst [vmem:[%s3] sm:$0xff] %v715
  %723 = vst [vmem:[%s3 + $0x8] sm:$0xff] %v720
  // Predicated region
  $region14: #{neural_reward_model.1} parent=0 // pred_check
    _
  $region15: #{neural_reward_model.1} parent=0 // pred_check_branch
    %725 = sbr.rel (0) target = $region17
  $region16: #{neural_reward_model.1} parent=0 // pred_region
    _
  $region17: #{neural_reward_model.1} parent=0 // pred_fallthru
    _
  // Predicated region
  $region18: #{neural_reward_model.1} parent=0 // pred_check
    _
  $region19: #{neural_reward_model.1} parent=0 // pred_check_branch
    %727 = sbr.rel (0) target = $region21
  $region20: #{neural_reward_model.1} parent=0 // pred_region
    _
  $region21: #{neural_reward_model.1} parent=0 // pred_fallthru
    _

</llo_original>
